<compile_context>
chip_gen: v7x
topology: tpu7x:2x2x1
jax: 0.10.0
libtpu: 0.0.40
codegen_flags: <defaults>
</compile_context>

<pallas_src>
import jax
import jax.numpy as jnp
from jax.experimental import pallas as pl
from jax.experimental.pallas import tpu as pltpu


# ----------------------------------------------------------------------------
# Fused Pallas kernel (all LSTM layers + FC in one call)
# ----------------------------------------------------------------------------
def make_fused_kernel(num_layers):
    def kernel(*refs):
        # refs layout: x, (w_gates, b_gates) * num_layers, fc_w, fc_b, out
        x_ref = refs[0]
        h = x_ref[...]                                   # (B, in) fp32
        idx = 1
        for _ in range(num_layers):
            w_ref = refs[idx]                            # (3, in, H) gates i,g,o
            b_ref = refs[idx + 1]                        # (3, 1, H)
            idx += 2
            i = jax.nn.sigmoid(
                jnp.dot(h, w_ref[0], preferred_element_type=jnp.float32)
                + b_ref[0])
            g = jnp.tanh(
                jnp.dot(h, w_ref[1], preferred_element_type=jnp.float32)
                + b_ref[1])
            o = jax.nn.sigmoid(
                jnp.dot(h, w_ref[2], preferred_element_type=jnp.float32)
                + b_ref[2])
            # forget gate & c_prev terms are identically zero (zero init,
            # seq_len == 1), so c_new = i * g.
            h = o * jnp.tanh(i * g)
            # TODO(synk): nn.LSTM inter-layer dropout is training-only; the
            # inference forward is identity, so it is intentionally omitted.
        fc_w_ref = refs[idx]                             # (H, out_dim)
        fc_b_ref = refs[idx + 1]                         # (1, out_dim)
        out_ref = refs[idx + 2]                          # (B, out_dim)
        out_ref[...] = (
            jnp.dot(h, fc_w_ref[...], preferred_element_type=jnp.float32)
            + fc_b_ref[...])
    return kernel


# ----------------------------------------------------------------------------
# One-time parameter preparation (hoists transposes / bias sums / gate split)
# ----------------------------------------------------------------------------
def prepare_params(params, hidden_dim, num_layers):
    """Pack PyTorch-layout LSTM/FC params for the fused kernel."""
    H = hidden_dim
    layers = []
    for l in range(num_layers):
        w_ih, w_hh, b_ih, b_hh = params[f"lstm_l{l}"]    # w_ih: (4H, in)
        del w_hh                                          # dead: h_prev == 0
        b = b_ih + b_hh
        gate_idx = (0, 2, 3)                              # PyTorch i, f, g, o -> keep i, g, o
        w_gates = jnp.stack(
            [w_ih[k * H:(k + 1) * H, :].T for k in gate_idx])        # (3, in, H)
        b_gates = jnp.stack(
            [b[k * H:(k + 1) * H].reshape(1, H) for k in gate_idx])  # (3, 1, H)
        layers.append((w_gates, b_gates))
    w_fc, b_fc = params["fc"]                             # (out, H), (out,)
    fc_w = w_fc.T                                         # (H, out)
    fc_b = b_fc.reshape(1, -1)                            # (1, out)
    return layers, fc_w, fc_b


# ----------------------------------------------------------------------------
# Forward wrapper: single fused pallas_call
# ----------------------------------------------------------------------------
def lstm_model_forward(x, prepared_layers, fc_w, fc_b):
    B = x.shape[0]
    H, out_dim = fc_w.shape
    num_layers = len(prepared_layers)

    inputs = [x]
    for w_gates, b_gates in prepared_layers:
        inputs += [w_gates, b_gates]
    inputs += [fc_w, fc_b]

    # Advisory cost estimate (fused op is latency-bound; helps XLA scheduling).
    flops = 0
    transcendentals = 0
    for w_gates, _ in prepared_layers:
        d_in = w_gates.shape[1]
        flops += 3 * 2 * B * d_in * H + 4 * B * H        # 3 dots + elementwise
        transcendentals += 4 * B * H                      # 2 sigmoid + 2 tanh
    flops += 2 * B * H * out_dim
    bytes_accessed = sum(int(a.size) * 4 for a in inputs) + B * out_dim * 4

    vmem = pltpu.MemorySpace.VMEM
    out = pl.pallas_call(
        make_fused_kernel(num_layers),
        out_shape=jax.ShapeDtypeStruct((B, out_dim), jnp.float32),
        in_specs=[pl.BlockSpec(memory_space=vmem) for _ in inputs],
        out_specs=pl.BlockSpec(memory_space=vmem),
        cost_estimate=pl.CostEstimate(
            flops=flops,
            transcendentals=transcendentals,
            bytes_accessed=bytes_accessed),
    )(*inputs)
    return out


# ----------------------------------------------------------------------------
# Pure-JAX reference (full PyTorch LSTM-cell math, for correctness check)
# ----------------------------------------------------------------------------
def reference_forward(x, params, hidden_dim, num_layers):
    B = x.shape[0]
    H = hidden_dim
    layer_in = x
    for l in range(num_layers):
        w_ih, w_hh, b_ih, b_hh = params[f"lstm_l{l}"]
        h0 = jnp.zeros((B, H), jnp.float32)
        c0 = jnp.zeros((B, H), jnp.float32)
        gates = layer_in @ w_ih.T + h0 @ w_hh.T + b_ih + b_hh
        i = jax.nn.sigmoid(gates[:, 0 * H:1 * H])
        f = jax.nn.sigmoid(gates[:, 1 * H:2 * H])
        g = jnp.tanh(gates[:, 2 * H:3 * H])
        o = jax.nn.sigmoid(gates[:, 3 * H:4 * H])
        c = f * c0 + i * g
        layer_in = o * jnp.tanh(c)
    w_fc, b_fc = params["fc"]
    return layer_in @ w_fc.T + b_fc


# ----------------------------------------------------------------------------
# Deterministic parameter init (shapes per nn.LSTM / nn.Linear)
# ----------------------------------------------------------------------------
def init_params(key, input_dim, hidden_dim, output_dim, num_layers):
    params = {}
    k = 1.0 / jnp.sqrt(hidden_dim)
    for l in range(num_layers):
        in_dim = input_dim if l == 0 else hidden_dim
        key, k1, k2, k3, k4 = jax.random.split(key, 5)
        w_ih = jax.random.uniform(k1, (4 * hidden_dim, in_dim), jnp.float32, -k, k)
        w_hh = jax.random.uniform(k2, (4 * hidden_dim, hidden_dim), jnp.float32, -k, k)
        b_ih = jax.random.uniform(k3, (4 * hidden_dim,), jnp.float32, -k, k)
        b_hh = jax.random.uniform(k4, (4 * hidden_dim,), jnp.float32, -k, k)
        params[f"lstm_l{l}"] = (w_ih, w_hh, b_ih, b_hh)
    key, k1, k2 = jax.random.split(key, 3)
    w_fc = jax.random.uniform(k1, (output_dim, hidden_dim), jnp.float32, -k, k)
    b_fc = jax.random.uniform(k2, (output_dim,), jnp.float32, -k, k)
    params["fc"] = (w_fc, b_fc)
    return params


if __name__ == "__main__":
    batch = 8
    input_dim = 16
    hidden_dim = 32
    output_dim = 1
    num_layers = 2

    key = jax.random.PRNGKey(0)
    key, kx = jax.random.split(key)
    x = jax.random.normal(kx, (batch, input_dim), jnp.float32)
    params = init_params(key, input_dim, hidden_dim, output_dim, num_layers)

    # One-time weight packing (outside the hot path).
    prepared_layers, fc_w, fc_b = prepare_params(params, hidden_dim, num_layers)

    out = lstm_model_forward(x, prepared_layers, fc_w, fc_b)
    out = jax.block_until_ready(out)

    ref = reference_forward(x, params, hidden_dim, num_layers)
    assert out.shape == (batch, output_dim)
    assert jnp.allclose(out, ref, atol=1e-5, rtol=1e-5), "mismatch vs reference"

    print("KERNEL_OK")
</pallas_src>

<mosaic_0001>
module attributes {stable_mosaic.version = 11 : i64} {
  func.func @kernel(%arg0: memref<8x16xf32, #tpu.memory_space<vmem>>, %arg1: memref<3x16x32xf32, #tpu.memory_space<vmem>>, %arg2: memref<3x1x32xf32, #tpu.memory_space<vmem>>, %arg3: memref<3x32x32xf32, #tpu.memory_space<vmem>>, %arg4: memref<3x1x32xf32, #tpu.memory_space<vmem>>, %arg5: memref<32x1xf32, #tpu.memory_space<vmem>>, %arg6: memref<1x1xf32, #tpu.memory_space<vmem>>, %arg7: memref<8x1xf32, #tpu.memory_space<vmem>>) attributes {dimension_semantics = [], scalar_prefetch = 0 : i64, scratch_operands = 0 : i64, tpu.core_type = #tpu.core_type<tc>} {
    %c0 = arith.constant 0 : index
    %c0_0 = arith.constant 0 : index
    %0 = vector.load %arg0[%c0, %c0_0] : memref<8x16xf32, #tpu.memory_space<vmem>>, vector<8x16xf32>
    %c0_1 = arith.constant 0 : index
    %c0_2 = arith.constant 0 : index
    %c0_3 = arith.constant 0 : index
    %1 = vector.load %arg1[%c0_1, %c0_2, %c0_3] : memref<3x16x32xf32, #tpu.memory_space<vmem>>, vector<1x16x32xf32>
    %2 = vector.shape_cast %1 : vector<1x16x32xf32> to vector<16x32xf32>
    %cst = arith.constant dense<0.000000e+00> : vector<8x32xf32>
    %3 = tpu.matmul %0, %2, %cst {dimension_numbers = #tpu.dot_dimension_numbers<[1], [0], [0], [1], [0, 0, 1, 1], [], []>} : vector<8x16xf32>, vector<16x32xf32>, vector<8x32xf32> -> vector<8x32xf32>
    %c0_4 = arith.constant 0 : index
    %c0_5 = arith.constant 0 : index
    %c0_6 = arith.constant 0 : index
    %4 = vector.load %arg2[%c0_4, %c0_5, %c0_6] : memref<3x1x32xf32, #tpu.memory_space<vmem>>, vector<1x1x32xf32>
    %5 = vector.shape_cast %4 : vector<1x1x32xf32> to vector<1x32xf32>
    %6 = vector.broadcast %5 : vector<1x32xf32> to vector<8x32xf32>
    %7 = arith.addf %3, %6 : vector<8x32xf32>
    %8 = arith.negf %7 : vector<8x32xf32>
    %9 = math.exp %8 : vector<8x32xf32>
    %cst_7 = arith.constant 1.000000e+00 : f32
    %10 = vector.broadcast %cst_7 : f32 to vector<8x32xf32>
    %11 = arith.addf %10, %9 : vector<8x32xf32>
    %12 = arith.divf %10, %11 : vector<8x32xf32>
    %c1 = arith.constant 1 : index
    %c0_8 = arith.constant 0 : index
    %c0_9 = arith.constant 0 : index
    %13 = vector.load %arg1[%c1, %c0_8, %c0_9] : memref<3x16x32xf32, #tpu.memory_space<vmem>>, vector<1x16x32xf32>
    %14 = vector.shape_cast %13 : vector<1x16x32xf32> to vector<16x32xf32>
    %cst_10 = arith.constant dense<0.000000e+00> : vector<8x32xf32>
    %15 = tpu.matmul %0, %14, %cst_10 {dimension_numbers = #tpu.dot_dimension_numbers<[1], [0], [0], [1], [0, 0, 1, 1], [], []>} : vector<8x16xf32>, vector<16x32xf32>, vector<8x32xf32> -> vector<8x32xf32>
    %c1_11 = arith.constant 1 : index
    %c0_12 = arith.constant 0 : index
    %c0_13 = arith.constant 0 : index
    %16 = vector.load %arg2[%c1_11, %c0_12, %c0_13] : memref<3x1x32xf32, #tpu.memory_space<vmem>>, vector<1x1x32xf32>
    %17 = vector.shape_cast %16 : vector<1x1x32xf32> to vector<1x32xf32>
    %18 = vector.broadcast %17 : vector<1x32xf32> to vector<8x32xf32>
    %19 = arith.addf %15, %18 : vector<8x32xf32>
    %20 = math.tanh %19 : vector<8x32xf32>
    %c2 = arith.constant 2 : index
    %c0_14 = arith.constant 0 : index
    %c0_15 = arith.constant 0 : index
    %21 = vector.load %arg1[%c2, %c0_14, %c0_15] : memref<3x16x32xf32, #tpu.memory_space<vmem>>, vector<1x16x32xf32>
    %22 = vector.shape_cast %21 : vector<1x16x32xf32> to vector<16x32xf32>
    %cst_16 = arith.constant dense<0.000000e+00> : vector<8x32xf32>
    %23 = tpu.matmul %0, %22, %cst_16 {dimension_numbers = #tpu.dot_dimension_numbers<[1], [0], [0], [1], [0, 0, 1, 1], [], []>} : vector<8x16xf32>, vector<16x32xf32>, vector<8x32xf32> -> vector<8x32xf32>
    %c2_17 = arith.constant 2 : index
    %c0_18 = arith.constant 0 : index
    %c0_19 = arith.constant 0 : index
    %24 = vector.load %arg2[%c2_17, %c0_18, %c0_19] : memref<3x1x32xf32, #tpu.memory_space<vmem>>, vector<1x1x32xf32>
    %25 = vector.shape_cast %24 : vector<1x1x32xf32> to vector<1x32xf32>
    %26 = vector.broadcast %25 : vector<1x32xf32> to vector<8x32xf32>
    %27 = arith.addf %23, %26 : vector<8x32xf32>
    %28 = arith.negf %27 : vector<8x32xf32>
    %29 = math.exp %28 : vector<8x32xf32>
    %cst_20 = arith.constant 1.000000e+00 : f32
    %30 = vector.broadcast %cst_20 : f32 to vector<8x32xf32>
    %31 = arith.addf %30, %29 : vector<8x32xf32>
    %32 = arith.divf %30, %31 : vector<8x32xf32>
    %33 = arith.mulf %12, %20 : vector<8x32xf32>
    %34 = math.tanh %33 : vector<8x32xf32>
    %35 = arith.mulf %32, %34 : vector<8x32xf32>
    %c0_21 = arith.constant 0 : index
    %c0_22 = arith.constant 0 : index
    %c0_23 = arith.constant 0 : index
    %36 = vector.load %arg3[%c0_21, %c0_22, %c0_23] : memref<3x32x32xf32, #tpu.memory_space<vmem>>, vector<1x32x32xf32>
    %37 = vector.shape_cast %36 : vector<1x32x32xf32> to vector<32x32xf32>
    %cst_24 = arith.constant dense<0.000000e+00> : vector<8x32xf32>
    %38 = tpu.matmul %35, %37, %cst_24 {dimension_numbers = #tpu.dot_dimension_numbers<[1], [0], [0], [1], [0, 0, 1, 1], [], []>} : vector<8x32xf32>, vector<32x32xf32>, vector<8x32xf32> -> vector<8x32xf32>
    %c0_25 = arith.constant 0 : index
    %c0_26 = arith.constant 0 : index
    %c0_27 = arith.constant 0 : index
    %39 = vector.load %arg4[%c0_25, %c0_26, %c0_27] : memref<3x1x32xf32, #tpu.memory_space<vmem>>, vector<1x1x32xf32>
    %40 = vector.shape_cast %39 : vector<1x1x32xf32> to vector<1x32xf32>
    %41 = vector.broadcast %40 : vector<1x32xf32> to vector<8x32xf32>
    %42 = arith.addf %38, %41 : vector<8x32xf32>
    %43 = arith.negf %42 : vector<8x32xf32>
    %44 = math.exp %43 : vector<8x32xf32>
    %cst_28 = arith.constant 1.000000e+00 : f32
    %45 = vector.broadcast %cst_28 : f32 to vector<8x32xf32>
    %46 = arith.addf %45, %44 : vector<8x32xf32>
    %47 = arith.divf %45, %46 : vector<8x32xf32>
    %c1_29 = arith.constant 1 : index
    %c0_30 = arith.constant 0 : index
    %c0_31 = arith.constant 0 : index
    %48 = vector.load %arg3[%c1_29, %c0_30, %c0_31] : memref<3x32x32xf32, #tpu.memory_space<vmem>>, vector<1x32x32xf32>
    %49 = vector.shape_cast %48 : vector<1x32x32xf32> to vector<32x32xf32>
    %cst_32 = arith.constant dense<0.000000e+00> : vector<8x32xf32>
    %50 = tpu.matmul %35, %49, %cst_32 {dimension_numbers = #tpu.dot_dimension_numbers<[1], [0], [0], [1], [0, 0, 1, 1], [], []>} : vector<8x32xf32>, vector<32x32xf32>, vector<8x32xf32> -> vector<8x32xf32>
    %c1_33 = arith.constant 1 : index
    %c0_34 = arith.constant 0 : index
    %c0_35 = arith.constant 0 : index
    %51 = vector.load %arg4[%c1_33, %c0_34, %c0_35] : memref<3x1x32xf32, #tpu.memory_space<vmem>>, vector<1x1x32xf32>
    %52 = vector.shape_cast %51 : vector<1x1x32xf32> to vector<1x32xf32>
    %53 = vector.broadcast %52 : vector<1x32xf32> to vector<8x32xf32>
    %54 = arith.addf %50, %53 : vector<8x32xf32>
    %55 = math.tanh %54 : vector<8x32xf32>
    %c2_36 = arith.constant 2 : index
    %c0_37 = arith.constant 0 : index
    %c0_38 = arith.constant 0 : index
    %56 = vector.load %arg3[%c2_36, %c0_37, %c0_38] : memref<3x32x32xf32, #tpu.memory_space<vmem>>, vector<1x32x32xf32>
    %57 = vector.shape_cast %56 : vector<1x32x32xf32> to vector<32x32xf32>
    %cst_39 = arith.constant dense<0.000000e+00> : vector<8x32xf32>
    %58 = tpu.matmul %35, %57, %cst_39 {dimension_numbers = #tpu.dot_dimension_numbers<[1], [0], [0], [1], [0, 0, 1, 1], [], []>} : vector<8x32xf32>, vector<32x32xf32>, vector<8x32xf32> -> vector<8x32xf32>
    %c2_40 = arith.constant 2 : index
    %c0_41 = arith.constant 0 : index
    %c0_42 = arith.constant 0 : index
    %59 = vector.load %arg4[%c2_40, %c0_41, %c0_42] : memref<3x1x32xf32, #tpu.memory_space<vmem>>, vector<1x1x32xf32>
    %60 = vector.shape_cast %59 : vector<1x1x32xf32> to vector<1x32xf32>
    %61 = vector.broadcast %60 : vector<1x32xf32> to vector<8x32xf32>
    %62 = arith.addf %58, %61 : vector<8x32xf32>
    %63 = arith.negf %62 : vector<8x32xf32>
    %64 = math.exp %63 : vector<8x32xf32>
    %cst_43 = arith.constant 1.000000e+00 : f32
    %65 = vector.broadcast %cst_43 : f32 to vector<8x32xf32>
    %66 = arith.addf %65, %64 : vector<8x32xf32>
    %67 = arith.divf %65, %66 : vector<8x32xf32>
    %68 = arith.mulf %47, %55 : vector<8x32xf32>
    %69 = math.tanh %68 : vector<8x32xf32>
    %70 = arith.mulf %67, %69 : vector<8x32xf32>
    %c0_44 = arith.constant 0 : index
    %c0_45 = arith.constant 0 : index
    %71 = vector.load %arg5[%c0_44, %c0_45] : memref<32x1xf32, #tpu.memory_space<vmem>>, vector<32x1xf32>
    %cst_46 = arith.constant dense<0.000000e+00> : vector<8x1xf32>
    %72 = tpu.matmul %70, %71, %cst_46 {dimension_numbers = #tpu.dot_dimension_numbers<[1], [0], [0], [1], [0, 0, 1, 1], [], []>} : vector<8x32xf32>, vector<32x1xf32>, vector<8x1xf32> -> vector<8x1xf32>
    %c0_47 = arith.constant 0 : index
    %c0_48 = arith.constant 0 : index
    %73 = vector.load %arg6[%c0_47, %c0_48] : memref<1x1xf32, #tpu.memory_space<vmem>>, vector<1x1xf32>
    %74 = vector.broadcast %73 : vector<1x1xf32> to vector<8x1xf32>
    %75 = arith.addf %72, %74 : vector<8x1xf32>
    %c0_49 = arith.constant 0 : index
    %c0_50 = arith.constant 0 : index
    %76 = vector.load %arg7[%c0_49, %c0_50] : memref<8x1xf32, #tpu.memory_space<vmem>>, vector<8x1xf32>
    tpu.vector_store %arg7[%c0_49, %c0_50], %75 {strides = array<i32>} : memref<8x1xf32, #tpu.memory_space<vmem>>, vector<8x1xf32>,
    return
  }
}

</mosaic_0001>

<llo_original>
// kernel: tpu_custom_call.1
$region0: #{tpu_custom_call.1}
  #allocation0 [shape = 'u32[]', space=smem, size = 0x4, offset = 0x4, fixed_abs, tag = 'smem constant byte address 0x4 - core index']
  #allocation1 [shape = 'u32[144,128]{1,0:T(1,128)}', space=vmem, size = 0x12000, scoped, tag = 'internal scratch']
  #allocation2 [shape = 'f32[1,1]{1,0:T(1,128)S(1)}', space=vmem, size = 0x200, scoped, tag = 'scoped memory for tpu_custom_call.1']
  %s0 = inlined_call_operand.vmem [shape: f32[8,16], index: 0, kind: input, shape index: {}]
  %s1 = inlined_call_operand.hbm [shape: f32[3,16,32], index: 1, kind: input, shape index: {}]
  %s2 = inlined_call_operand.vmem [shape: f32[3,1,32], index: 2, kind: input, shape index: {}]
  %s3 = inlined_call_operand.hbm [shape: f32[3,32,32], index: 3, kind: input, shape index: {}]
  %s4 = inlined_call_operand.vmem [shape: f32[3,1,32], index: 4, kind: input, shape index: {}]
  %s5 = inlined_call_operand.vmem [shape: f32[32,1], index: 5, kind: input, shape index: {}]
  %s6 = inlined_call_operand.<no memory space> [shape: f32[1,1], index: 6, kind: input, shape index: {}]
  %s7 = inlined_call_operand.vmem [shape: f32[8,1], index: 7, kind: output, shape index: {}]
  %s8 = sld [smem:[#allocation0]]
  $region46: #{tpu_custom_call.1} parent=0
    _
  %s10 = ssub.s32 1, %s8
  %s11 = scalar_select 0, %s10, %s8
  %v12 = vstv %s6
  %13 = vst [vmem:[#allocation2] sm:$0x1] %v12
  $region1: #{tpu_custom_call.1} parent=0
    #allocation3 [shape = 'u8[24576]{0}', space=vmem, size = 0x6000, scoped, tag = 'input window, operand 1, single buffered']
    #allocation4 [shape = 's32[1]{0}', space=sflag, size = 0x4, scoped, tag = 'scoped memory for tpu_custom_call.1']
    #allocation5 [shape = 'u8[49152]{0}', space=vmem, size = 0xc000, scoped, tag = 'input window, operand 3, single buffered']
    #allocation6 [shape = 's32[1]{0}', space=sflag, size = 0x4, scoped, tag = 'scoped memory for tpu_custom_call.1']
    %14 = vsyncpa [#allocation4], 0
    %15 = vsyncpa [#allocation6], 0
    // Predicated region
    $region2: #{tpu_custom_call.1} parent=1 // pred_check
      _
    $region3: #{tpu_custom_call.1} parent=1 // pred_check_branch
      %17 = sbr.rel (0) target = $region5
    $region4: #{tpu_custom_call.1} parent=1 // pred_region
      _
    $region5: #{tpu_custom_call.1} parent=1 // pred_fallthru
      _
    // Predicated region
    $region6: #{tpu_custom_call.1} parent=1 // pred_check
      _
    $region7: #{tpu_custom_call.1} parent=1 // pred_check_branch
      %19 = sbr.rel (0) target = $region9
    $region8: #{tpu_custom_call.1} parent=1 // pred_region
      %s21 = ssub.s32 768, 768
      %22 = vsyncadd [#allocation4], %s21
      %s23 = sshll.u32 [#allocation3], 4
      %s24 = int_to_ptr.vmem [resolvable:$true] %s23
      %29 = dma.hbm_to_vmem [thread:$0]  %s1, 768, %s24, [#allocation4], 128, 128, 8
    $region9: #{tpu_custom_call.1} parent=1 // pred_fallthru
      _
    // Predicated region
    $region10: #{tpu_custom_call.1} parent=1 // pred_check
      _
    $region11: #{tpu_custom_call.1} parent=1 // pred_check_branch
      %31 = sbr.rel (0) target = $region13
    $region12: #{tpu_custom_call.1} parent=1 // pred_region
      _
    $region13: #{tpu_custom_call.1} parent=1 // pred_fallthru
      _
    // Predicated region
    $region14: #{tpu_custom_call.1} parent=1 // pred_check
      _
    $region15: #{tpu_custom_call.1} parent=1 // pred_check_branch
      %33 = sbr.rel (0) target = $region17
    $region16: #{tpu_custom_call.1} parent=1 // pred_region
      %s35 = ssub.s32 1536, 1536
      %36 = vsyncadd [#allocation6], %s35
      %s37 = sshll.u32 [#allocation5], 4
      %s38 = int_to_ptr.vmem [resolvable:$true] %s37
      %43 = dma.hbm_to_vmem [thread:$0]  %s3, 1536, %s38, [#allocation6], 128, 128, 8
    $region17: #{tpu_custom_call.1} parent=1 // pred_fallthru
      _
    // Predicated region
    $region18: #{tpu_custom_call.1} parent=1 // pred_check
      _
    $region19: #{tpu_custom_call.1} parent=1 // pred_check_branch
      %45 = sbr.rel (0) target = $region21
    $region20: #{tpu_custom_call.1} parent=1 // pred_region
      _
    $region21: #{tpu_custom_call.1} parent=1 // pred_fallthru
      _
    // Predicated region
    $region22: #{tpu_custom_call.1} parent=1 // pred_check
      _
    $region23: #{tpu_custom_call.1} parent=1 // pred_check_branch
      %47 = sbr.rel (0) target = $region25
    $region24: #{tpu_custom_call.1} parent=1 // pred_region
      _
    $region25: #{tpu_custom_call.1} parent=1 // pred_fallthru
      _
    // Predicated region
    $region26: #{tpu_custom_call.1} parent=1 // pred_check
      _
    $region27: #{tpu_custom_call.1} parent=1 // pred_check_branch
      %49 = sbr.rel (0) target = $region29
    $region28: #{tpu_custom_call.1} parent=1 // pred_region
      _
    $region29: #{tpu_custom_call.1} parent=1 // pred_fallthru
      _
    // Predicated region
    $region30: #{tpu_custom_call.1} parent=1 // pred_check
      _
    $region31: #{tpu_custom_call.1} parent=1 // pred_check_branch
      %51 = sbr.rel (0) target = $region33
    $region32: #{tpu_custom_call.1} parent=1 // pred_region
      %52 = dma.done [#allocation4], 768
    $region33: #{tpu_custom_call.1} parent=1 // pred_fallthru
      _
    // Predicated region
    $region34: #{tpu_custom_call.1} parent=1 // pred_check
      _
    $region35: #{tpu_custom_call.1} parent=1 // pred_check_branch
      %54 = sbr.rel (0) target = $region37
    $region36: #{tpu_custom_call.1} parent=1 // pred_region
      %55 = dma.done [#allocation6], 1536
    $region37: #{tpu_custom_call.1} parent=1 // pred_fallthru
      _
    %v56 = vld [vmem:[%s0] sm:$0xff]
    %v57 = vld [vmem:[#allocation3] sm:$0xff]
    %v58 = vld [vmem:[#allocation3 + $0x8] sm:$0xff]
    %v59 = vld [vmem:[%s2] sm:$0x1]
    %v61 = vlaneseq
    %v62 = vshrl.u32 %v61, 7
    %v63 = vsub.s32 0, %v62
    %v64 = vrot.slane %v59, %v63
    %vm66 = vcmask 130048
    %v68 = vsel %vm66, %v56, 0
    %70 = vmatprep.subr.mxu0 0.0
    %71 = vmatpush1.msra.mxu0 %v57
    %72 = vmatprep.subr.mxu0 0.0
    %73 = vmatpush1.msra.mxu0 %v58
    %74 = vmatprep.subr.mxu0 0.0
    %75 = vmatpush1.msra.mxu0 0.0
    %76 = vmatprep.subr.mxu0 0.0
    %77 = vmatpush1.msra.mxu0 0.0
    %78 = vmatprep.subr.mxu0 0.0
    %79 = vmatpush1.msra.mxu0 0.0
    %80 = vmatprep.subr.mxu0 0.0
    %81 = vmatpush1.msra.mxu0 0.0
    %82 = vmatprep.subr.mxu0 0.0
    %83 = vmatpush1.msra.mxu0 0.0
    %84 = vmatprep.subr.mxu0 0.0
    %85 = vmatpush1.msra.mxu0 0.0
    %86 = vmatprep.subr.mxu0 0.0
    %87 = vmatpush1.msra.mxu0 0.0
    %88 = vmatprep.subr.mxu0 0.0
    %89 = vmatpush1.msra.mxu0 0.0
    %90 = vmatprep.subr.mxu0 0.0
    %91 = vmatpush1.msra.mxu0 0.0
    %92 = vmatprep.subr.mxu0 0.0
    %93 = vmatpush1.msra.mxu0 0.0
    %94 = vmatprep.subr.mxu0 0.0
    %95 = vmatpush1.msra.mxu0 0.0
    %96 = vmatprep.subr.mxu0 0.0
    %97 = vmatpush1.msra.mxu0 0.0
    %98 = vmatprep.subr.mxu0 0.0
    %99 = vmatpush1.msra.mxu0 0.0
    %100 = vmatprep.subr.mxu0 0.0
    %101 = vmatpush1.msra.mxu0 0.0
    %102 = vmatprep.subr.mxu0 0.0
    %103 = vmatpush1.msra.mxu0 0.0
    %104 = vmatprep.subr.mxu0 0.0
    %105 = vmatpush1.msra.mxu0 0.0
    %106 = vmatprep.subr.mxu0 0.0
    %107 = vmatpush1.msra.mxu0 0.0
    %108 = vmatprep.subr.mxu0 0.0
    %109 = vmatpush1.msra.mxu0 0.0
    %110 = vmatprep.subr.mxu0 0.0
    %111 = vmatpush1.msra.mxu0 0.0
    %112 = vmatprep.subr.mxu0 0.0
    %113 = vmatpush1.msra.mxu0 0.0
    %114 = vmatprep.subr.mxu0 0.0
    %115 = vmatpush1.msra.mxu0 0.0
    %116 = vmatprep.subr.mxu0 0.0
    %117 = vmatpush1.msra.mxu0 0.0
    %118 = vmatprep.subr.mxu0 0.0
    %119 = vmatpush1.msra.mxu0 0.0
    %120 = vmatprep.subr.mxu0 0.0
    %121 = vmatpush1.msra.mxu0 0.0
    %122 = vmatprep.subr.mxu0 0.0
    %123 = vmatpush1.msra.mxu0 0.0
    %124 = vmatprep.subr.mxu0 0.0
    %125 = vmatpush1.msra.mxu0 0.0
    %126 = vmatprep.subr.mxu0 0.0
    %127 = vmatpush1.msra.mxu0 0.0
    %128 = vmatprep.subr.mxu0 0.0
    %129 = vmatpush1.msra.mxu0 0.0
    %130 = vmatprep.subr.mxu0 0.0
    %131 = vmatpush1.msra.mxu0 0.0
    %132 = vmatprep.subr.mxu0 0.0
    %133 = vmatpush1.msra.mxu0 0.0
    %134 = vmatprep.mubr.f32.mxu0 0.0
    %135 = vmatmul.mubr.f32.gmra.mrb[0].mxu0 %v68
    %v136 = vpop.f32.mrb[0].mxu0
    %v137 = vadd.f32 %v64, %v136
    %v138 = vpop.f32.mrb[0].mxu0
    %139 = vdwg.mxu0
    %v140 = vxor.u32 %v137, 2147483648
    %v141 = vmul.f32 %v140, 1.442695
    %v142 = vpow.pop %v141
    %v143 = vadd.f32 %v142, 1.0
    %v144 = vrcp.pop %v143
    %v145 = vmul.f32 1.0, %v144
    %s146 = scalar_lea.vmem [#allocation3], 16
    %v147 = vld [vmem:[%s146] sm:$0xff]
    %v148 = vld [vmem:[%s146 + $0x8] sm:$0xff]
    %s149 = scalar_lea.vmem %s2, 1
    %v150 = vld [vmem:[%s149] sm:$0x1]
    %v152 = vlaneseq
    %v153 = vshrl.u32 %v152, 7
    %v154 = vsub.s32 0, %v153
    %v155 = vrot.slane %v150, %v154
    %157 = vmatprep.subr.mxu0 0.0
    %158 = vmatpush1.msra.mxu0 %v147
    %159 = vmatprep.subr.mxu0 0.0
    %160 = vmatpush1.msra.mxu0 %v148
    %161 = vmatprep.subr.mxu0 0.0
    %162 = vmatpush1.msra.mxu0 0.0
    %163 = vmatprep.subr.mxu0 0.0
    %164 = vmatpush1.msra.mxu0 0.0
    %165 = vmatprep.subr.mxu0 0.0
    %166 = vmatpush1.msra.mxu0 0.0
    %167 = vmatprep.subr.mxu0 0.0
    %168 = vmatpush1.msra.mxu0 0.0
    %169 = vmatprep.subr.mxu0 0.0
    %170 = vmatpush1.msra.mxu0 0.0
    %171 = vmatprep.subr.mxu0 0.0
    %172 = vmatpush1.msra.mxu0 0.0
    %173 = vmatprep.subr.mxu0 0.0
    %174 = vmatpush1.msra.mxu0 0.0
    %175 = vmatprep.subr.mxu0 0.0
    %176 = vmatpush1.msra.mxu0 0.0
    %177 = vmatprep.subr.mxu0 0.0
    %178 = vmatpush1.msra.mxu0 0.0
    %179 = vmatprep.subr.mxu0 0.0
    %180 = vmatpush1.msra.mxu0 0.0
    %181 = vmatprep.subr.mxu0 0.0
    %182 = vmatpush1.msra.mxu0 0.0
    %183 = vmatprep.subr.mxu0 0.0
    %184 = vmatpush1.msra.mxu0 0.0
    %185 = vmatprep.subr.mxu0 0.0
    %186 = vmatpush1.msra.mxu0 0.0
    %187 = vmatprep.subr.mxu0 0.0
    %188 = vmatpush1.msra.mxu0 0.0
    %189 = vmatprep.subr.mxu0 0.0
    %190 = vmatpush1.msra.mxu0 0.0
    %191 = vmatprep.subr.mxu0 0.0
    %192 = vmatpush1.msra.mxu0 0.0
    %193 = vmatprep.subr.mxu0 0.0
    %194 = vmatpush1.msra.mxu0 0.0
    %195 = vmatprep.subr.mxu0 0.0
    %196 = vmatpush1.msra.mxu0 0.0
    %197 = vmatprep.subr.mxu0 0.0
    %198 = vmatpush1.msra.mxu0 0.0
    %199 = vmatprep.subr.mxu0 0.0
    %200 = vmatpush1.msra.mxu0 0.0
    %201 = vmatprep.subr.mxu0 0.0
    %202 = vmatpush1.msra.mxu0 0.0
    %203 = vmatprep.subr.mxu0 0.0
    %204 = vmatpush1.msra.mxu0 0.0
    %205 = vmatprep.subr.mxu0 0.0
    %206 = vmatpush1.msra.mxu0 0.0
    %207 = vmatprep.subr.mxu0 0.0
    %208 = vmatpush1.msra.mxu0 0.0
    %209 = vmatprep.subr.mxu0 0.0
    %210 = vmatpush1.msra.mxu0 0.0
    %211 = vmatprep.subr.mxu0 0.0
    %212 = vmatpush1.msra.mxu0 0.0
    %213 = vmatprep.subr.mxu0 0.0
    %214 = vmatpush1.msra.mxu0 0.0
    %215 = vmatprep.subr.mxu0 0.0
    %216 = vmatpush1.msra.mxu0 0.0
    %217 = vmatprep.subr.mxu0 0.0
    %218 = vmatpush1.msra.mxu0 0.0
    %219 = vmatprep.subr.mxu0 0.0
    %220 = vmatpush1.msra.mxu0 0.0
    %221 = vmatprep.mubr.f32.mxu0 0.0
    %222 = vmatmul.mubr.f32.gmra.mrb[0].mxu0 %v68
    %v223 = vpop.f32.mrb[0].mxu0
    %v224 = vadd.f32 %v155, %v223
    %v225 = vpop.f32.mrb[0].mxu0
    %226 = vdwg.mxu0
    %v227 = vtanh.pop %v224
    %s228 = scalar_lea.vmem [#allocation3], 32
    %v229 = vld [vmem:[%s228] sm:$0xff]
    %v230 = vld [vmem:[%s228 + $0x8] sm:$0xff]
    %s231 = scalar_lea.vmem %s2, 2
    %v232 = vld [vmem:[%s231] sm:$0x1]
    %v234 = vlaneseq
    %v235 = vshrl.u32 %v234, 7
    %v236 = vsub.s32 0, %v235
    %v237 = vrot.slane %v232, %v236
    %239 = vmatprep.subr.mxu0 0.0
    %240 = vmatpush1.msra.mxu0 %v229
    %241 = vmatprep.subr.mxu0 0.0
    %242 = vmatpush1.msra.mxu0 %v230
    %243 = vmatprep.subr.mxu0 0.0
    %244 = vmatpush1.msra.mxu0 0.0
    %245 = vmatprep.subr.mxu0 0.0
    %246 = vmatpush1.msra.mxu0 0.0
    %247 = vmatprep.subr.mxu0 0.0
    %248 = vmatpush1.msra.mxu0 0.0
    %249 = vmatprep.subr.mxu0 0.0
    %250 = vmatpush1.msra.mxu0 0.0
    %251 = vmatprep.subr.mxu0 0.0
    %252 = vmatpush1.msra.mxu0 0.0
    %253 = vmatprep.subr.mxu0 0.0
    %254 = vmatpush1.msra.mxu0 0.0
    %255 = vmatprep.subr.mxu0 0.0
    %256 = vmatpush1.msra.mxu0 0.0
    %257 = vmatprep.subr.mxu0 0.0
    %258 = vmatpush1.msra.mxu0 0.0
    %259 = vmatprep.subr.mxu0 0.0
    %260 = vmatpush1.msra.mxu0 0.0
    %261 = vmatprep.subr.mxu0 0.0
    %262 = vmatpush1.msra.mxu0 0.0
    %263 = vmatprep.subr.mxu0 0.0
    %264 = vmatpush1.msra.mxu0 0.0
    %265 = vmatprep.subr.mxu0 0.0
    %266 = vmatpush1.msra.mxu0 0.0
    %267 = vmatprep.subr.mxu0 0.0
    %268 = vmatpush1.msra.mxu0 0.0
    %269 = vmatprep.subr.mxu0 0.0
    %270 = vmatpush1.msra.mxu0 0.0
    %271 = vmatprep.subr.mxu0 0.0
    %272 = vmatpush1.msra.mxu0 0.0
    %273 = vmatprep.subr.mxu0 0.0
    %274 = vmatpush1.msra.mxu0 0.0
    %275 = vmatprep.subr.mxu0 0.0
    %276 = vmatpush1.msra.mxu0 0.0
    %277 = vmatprep.subr.mxu0 0.0
    %278 = vmatpush1.msra.mxu0 0.0
    %279 = vmatprep.subr.mxu0 0.0
    %280 = vmatpush1.msra.mxu0 0.0
    %281 = vmatprep.subr.mxu0 0.0
    %282 = vmatpush1.msra.mxu0 0.0
    %283 = vmatprep.subr.mxu0 0.0
    %284 = vmatpush1.msra.mxu0 0.0
    %285 = vmatprep.subr.mxu0 0.0
    %286 = vmatpush1.msra.mxu0 0.0
    %287 = vmatprep.subr.mxu0 0.0
    %288 = vmatpush1.msra.mxu0 0.0
    %289 = vmatprep.subr.mxu0 0.0
    %290 = vmatpush1.msra.mxu0 0.0
    %291 = vmatprep.subr.mxu0 0.0
    %292 = vmatpush1.msra.mxu0 0.0
    %293 = vmatprep.subr.mxu0 0.0
    %294 = vmatpush1.msra.mxu0 0.0
    %295 = vmatprep.subr.mxu0 0.0
    %296 = vmatpush1.msra.mxu0 0.0
    %297 = vmatprep.subr.mxu0 0.0
    %298 = vmatpush1.msra.mxu0 0.0
    %299 = vmatprep.subr.mxu0 0.0
    %300 = vmatpush1.msra.mxu0 0.0
    %301 = vmatprep.subr.mxu0 0.0
    %302 = vmatpush1.msra.mxu0 0.0
    %303 = vmatprep.mubr.f32.mxu0 0.0
    %304 = vmatmul.mubr.f32.gmra.mrb[0].mxu0 %v68
    %v305 = vpop.f32.mrb[0].mxu0
    %v306 = vadd.f32 %v237, %v305
    %v307 = vpop.f32.mrb[0].mxu0
    %308 = vdwg.mxu0
    %v309 = vxor.u32 %v306, 2147483648
    %v310 = vmul.f32 %v309, 1.442695
    %v311 = vpow.pop %v310
    %v312 = vadd.f32 %v311, 1.0
    %v313 = vrcp.pop %v312
    %v314 = vmul.f32 1.0, %v313
    %v315 = vmul.f32 %v145, %v227
    %v316 = vtanh.pop %v315
    %v317 = vmul.f32 %v314, %v316
    %v318 = vld [vmem:[#allocation5] sm:$0xff]
    %v319 = vld [vmem:[#allocation5 + $0x8] sm:$0xff]
    %v320 = vld [vmem:[#allocation5 + $0x10] sm:$0xff]
    %v321 = vld [vmem:[#allocation5 + $0x18] sm:$0xff]
    %v322 = vld [vmem:[%s4] sm:$0x1]
    %v324 = vlaneseq
    %v325 = vshrl.u32 %v324, 7
    %v326 = vsub.s32 0, %v325
    %v327 = vrot.slane %v322, %v326
    %vm329 = vcmask 261120
    %v331 = vsel %vm329, %v317, 0
    %333 = vmatprep.subr.mxu0 0.0
    %334 = vmatpush1.msra.mxu0 %v318
    %335 = vmatprep.subr.mxu0 0.0
    %336 = vmatpush1.msra.mxu0 %v319
    %337 = vmatprep.subr.mxu0 0.0
    %338 = vmatpush1.msra.mxu0 %v320
    %339 = vmatprep.subr.mxu0 0.0
    %340 = vmatpush1.msra.mxu0 %v321
    %341 = vmatprep.subr.mxu0 0.0
    %342 = vmatpush1.msra.mxu0 0.0
    %343 = vmatprep.subr.mxu0 0.0
    %344 = vmatpush1.msra.mxu0 0.0
    %345 = vmatprep.subr.mxu0 0.0
    %346 = vmatpush1.msra.mxu0 0.0
    %347 = vmatprep.subr.mxu0 0.0
    %348 = vmatpush1.msra.mxu0 0.0
    %349 = vmatprep.subr.mxu0 0.0
    %350 = vmatpush1.msra.mxu0 0.0
    %351 = vmatprep.subr.mxu0 0.0
    %352 = vmatpush1.msra.mxu0 0.0
    %353 = vmatprep.subr.mxu0 0.0
    %354 = vmatpush1.msra.mxu0 0.0
    %355 = vmatprep.subr.mxu0 0.0
    %356 = vmatpush1.msra.mxu0 0.0
    %357 = vmatprep.subr.mxu0 0.0
    %358 = vmatpush1.msra.mxu0 0.0
    %359 = vmatprep.subr.mxu0 0.0
    %360 = vmatpush1.msra.mxu0 0.0
    %361 = vmatprep.subr.mxu0 0.0
    %362 = vmatpush1.msra.mxu0 0.0
    %363 = vmatprep.subr.mxu0 0.0
    %364 = vmatpush1.msra.mxu0 0.0
    %365 = vmatprep.subr.mxu0 0.0
    %366 = vmatpush1.msra.mxu0 0.0
    %367 = vmatprep.subr.mxu0 0.0
    %368 = vmatpush1.msra.mxu0 0.0
    %369 = vmatprep.subr.mxu0 0.0
    %370 = vmatpush1.msra.mxu0 0.0
    %371 = vmatprep.subr.mxu0 0.0
    %372 = vmatpush1.msra.mxu0 0.0
    %373 = vmatprep.subr.mxu0 0.0
    %374 = vmatpush1.msra.mxu0 0.0
    %375 = vmatprep.subr.mxu0 0.0
    %376 = vmatpush1.msra.mxu0 0.0
    %377 = vmatprep.subr.mxu0 0.0
    %378 = vmatpush1.msra.mxu0 0.0
    %379 = vmatprep.subr.mxu0 0.0
    %380 = vmatpush1.msra.mxu0 0.0
    %381 = vmatprep.subr.mxu0 0.0
    %382 = vmatpush1.msra.mxu0 0.0
    %383 = vmatprep.subr.mxu0 0.0
    %384 = vmatpush1.msra.mxu0 0.0
    %385 = vmatprep.subr.mxu0 0.0
    %386 = vmatpush1.msra.mxu0 0.0
    %387 = vmatprep.subr.mxu0 0.0
    %388 = vmatpush1.msra.mxu0 0.0
    %389 = vmatprep.subr.mxu0 0.0
    %390 = vmatpush1.msra.mxu0 0.0
    %391 = vmatprep.subr.mxu0 0.0
    %392 = vmatpush1.msra.mxu0 0.0
    %393 = vmatprep.subr.mxu0 0.0
    %394 = vmatpush1.msra.mxu0 0.0
    %395 = vmatprep.subr.mxu0 0.0
    %396 = vmatpush1.msra.mxu0 0.0
    %397 = vmatprep.mubr.f32.mxu0 0.0
    %398 = vmatmul.mubr.f32.gmra.mrb[0].mxu0 %v331
    %v399 = vpop.f32.mrb[0].mxu0
    %v400 = vadd.f32 %v327, %v399
    %v401 = vpop.f32.mrb[0].mxu0
    %402 = vdwg.mxu0
    %v403 = vxor.u32 %v400, 2147483648
    %v404 = vmul.f32 %v403, 1.442695
    %v405 = vpow.pop %v404
    %v406 = vadd.f32 %v405, 1.0
    %v407 = vrcp.pop %v406
    %v408 = vmul.f32 1.0, %v407
    %s409 = scalar_lea.vmem [#allocation5], 32
    %v410 = vld [vmem:[%s409] sm:$0xff]
    %v411 = vld [vmem:[%s409 + $0x8] sm:$0xff]
    %v412 = vld [vmem:[%s409 + $0x10] sm:$0xff]
    %v413 = vld [vmem:[%s409 + $0x18] sm:$0xff]
    %s414 = scalar_lea.vmem %s4, 1
    %v415 = vld [vmem:[%s414] sm:$0x1]
    %v417 = vlaneseq
    %v418 = vshrl.u32 %v417, 7
    %v419 = vsub.s32 0, %v418
    %v420 = vrot.slane %v415, %v419
    %422 = vmatprep.subr.mxu0 0.0
    %423 = vmatpush1.msra.mxu0 %v410
    %424 = vmatprep.subr.mxu0 0.0
    %425 = vmatpush1.msra.mxu0 %v411
    %426 = vmatprep.subr.mxu0 0.0
    %427 = vmatpush1.msra.mxu0 %v412
    %428 = vmatprep.subr.mxu0 0.0
    %429 = vmatpush1.msra.mxu0 %v413
    %430 = vmatprep.subr.mxu0 0.0
    %431 = vmatpush1.msra.mxu0 0.0
    %432 = vmatprep.subr.mxu0 0.0
    %433 = vmatpush1.msra.mxu0 0.0
    %434 = vmatprep.subr.mxu0 0.0
    %435 = vmatpush1.msra.mxu0 0.0
    %436 = vmatprep.subr.mxu0 0.0
    %437 = vmatpush1.msra.mxu0 0.0
    %438 = vmatprep.subr.mxu0 0.0
    %439 = vmatpush1.msra.mxu0 0.0
    %440 = vmatprep.subr.mxu0 0.0
    %441 = vmatpush1.msra.mxu0 0.0
    %442 = vmatprep.subr.mxu0 0.0
    %443 = vmatpush1.msra.mxu0 0.0
    %444 = vmatprep.subr.mxu0 0.0
    %445 = vmatpush1.msra.mxu0 0.0
    %446 = vmatprep.subr.mxu0 0.0
    %447 = vmatpush1.msra.mxu0 0.0
    %448 = vmatprep.subr.mxu0 0.0
    %449 = vmatpush1.msra.mxu0 0.0
    %450 = vmatprep.subr.mxu0 0.0
    %451 = vmatpush1.msra.mxu0 0.0
    %452 = vmatprep.subr.mxu0 0.0
    %453 = vmatpush1.msra.mxu0 0.0
    %454 = vmatprep.subr.mxu0 0.0
    %455 = vmatpush1.msra.mxu0 0.0
    %456 = vmatprep.subr.mxu0 0.0
    %457 = vmatpush1.msra.mxu0 0.0
    %458 = vmatprep.subr.mxu0 0.0
    %459 = vmatpush1.msra.mxu0 0.0
    %460 = vmatprep.subr.mxu0 0.0
    %461 = vmatpush1.msra.mxu0 0.0
    %462 = vmatprep.subr.mxu0 0.0
    %463 = vmatpush1.msra.mxu0 0.0
    %464 = vmatprep.subr.mxu0 0.0
    %465 = vmatpush1.msra.mxu0 0.0
    %466 = vmatprep.subr.mxu0 0.0
    %467 = vmatpush1.msra.mxu0 0.0
    %468 = vmatprep.subr.mxu0 0.0
    %469 = vmatpush1.msra.mxu0 0.0
    %470 = vmatprep.subr.mxu0 0.0
    %471 = vmatpush1.msra.mxu0 0.0
    %472 = vmatprep.subr.mxu0 0.0
    %473 = vmatpush1.msra.mxu0 0.0
    %474 = vmatprep.subr.mxu0 0.0
    %475 = vmatpush1.msra.mxu0 0.0
    %476 = vmatprep.subr.mxu0 0.0
    %477 = vmatpush1.msra.mxu0 0.0
    %478 = vmatprep.subr.mxu0 0.0
    %479 = vmatpush1.msra.mxu0 0.0
    %480 = vmatprep.subr.mxu0 0.0
    %481 = vmatpush1.msra.mxu0 0.0
    %482 = vmatprep.subr.mxu0 0.0
    %483 = vmatpush1.msra.mxu0 0.0
    %484 = vmatprep.subr.mxu0 0.0
    %485 = vmatpush1.msra.mxu0 0.0
    %486 = vmatprep.mubr.f32.mxu0 0.0
    %487 = vmatmul.mubr.f32.gmra.mrb[0].mxu0 %v331
    %v488 = vpop.f32.mrb[0].mxu0
    %v489 = vadd.f32 %v420, %v488
    %v490 = vpop.f32.mrb[0].mxu0
    %491 = vdwg.mxu0
    %v492 = vtanh.pop %v489
    %s493 = scalar_lea.vmem [#allocation5], 64
    %v494 = vld [vmem:[%s493] sm:$0xff]
    %v495 = vld [vmem:[%s493 + $0x8] sm:$0xff]
    %v496 = vld [vmem:[%s493 + $0x10] sm:$0xff]
    %v497 = vld [vmem:[%s493 + $0x18] sm:$0xff]
    %s498 = scalar_lea.vmem %s4, 2
    %v499 = vld [vmem:[%s498] sm:$0x1]
    %v501 = vlaneseq
    %v502 = vshrl.u32 %v501, 7
    %v503 = vsub.s32 0, %v502
    %v504 = vrot.slane %v499, %v503
    %506 = vmatprep.subr.mxu0 0.0
    %507 = vmatpush1.msra.mxu0 %v494
    %508 = vmatprep.subr.mxu0 0.0
    %509 = vmatpush1.msra.mxu0 %v495
    %510 = vmatprep.subr.mxu0 0.0
    %511 = vmatpush1.msra.mxu0 %v496
    %512 = vmatprep.subr.mxu0 0.0
    %513 = vmatpush1.msra.mxu0 %v497
    %514 = vmatprep.subr.mxu0 0.0
    %515 = vmatpush1.msra.mxu0 0.0
    %516 = vmatprep.subr.mxu0 0.0
    %517 = vmatpush1.msra.mxu0 0.0
    %518 = vmatprep.subr.mxu0 0.0
    %519 = vmatpush1.msra.mxu0 0.0
    %520 = vmatprep.subr.mxu0 0.0
    %521 = vmatpush1.msra.mxu0 0.0
    %522 = vmatprep.subr.mxu0 0.0
    %523 = vmatpush1.msra.mxu0 0.0
    %524 = vmatprep.subr.mxu0 0.0
    %525 = vmatpush1.msra.mxu0 0.0
    %526 = vmatprep.subr.mxu0 0.0
    %527 = vmatpush1.msra.mxu0 0.0
    %528 = vmatprep.subr.mxu0 0.0
    %529 = vmatpush1.msra.mxu0 0.0
    %530 = vmatprep.subr.mxu0 0.0
    %531 = vmatpush1.msra.mxu0 0.0
    %532 = vmatprep.subr.mxu0 0.0
    %533 = vmatpush1.msra.mxu0 0.0
    %534 = vmatprep.subr.mxu0 0.0
    %535 = vmatpush1.msra.mxu0 0.0
    %536 = vmatprep.subr.mxu0 0.0
    %537 = vmatpush1.msra.mxu0 0.0
    %538 = vmatprep.subr.mxu0 0.0
    %539 = vmatpush1.msra.mxu0 0.0
    %540 = vmatprep.subr.mxu0 0.0
    %541 = vmatpush1.msra.mxu0 0.0
    %542 = vmatprep.subr.mxu0 0.0
    %543 = vmatpush1.msra.mxu0 0.0
    %544 = vmatprep.subr.mxu0 0.0
    %545 = vmatpush1.msra.mxu0 0.0
    %546 = vmatprep.subr.mxu0 0.0
    %547 = vmatpush1.msra.mxu0 0.0
    %548 = vmatprep.subr.mxu0 0.0
    %549 = vmatpush1.msra.mxu0 0.0
    %550 = vmatprep.subr.mxu0 0.0
    %551 = vmatpush1.msra.mxu0 0.0
    %552 = vmatprep.subr.mxu0 0.0
    %553 = vmatpush1.msra.mxu0 0.0
    %554 = vmatprep.subr.mxu0 0.0
    %555 = vmatpush1.msra.mxu0 0.0
    %556 = vmatprep.subr.mxu0 0.0
    %557 = vmatpush1.msra.mxu0 0.0
    %558 = vmatprep.subr.mxu0 0.0
    %559 = vmatpush1.msra.mxu0 0.0
    %560 = vmatprep.subr.mxu0 0.0
    %561 = vmatpush1.msra.mxu0 0.0
    %562 = vmatprep.subr.mxu0 0.0
    %563 = vmatpush1.msra.mxu0 0.0
    %564 = vmatprep.subr.mxu0 0.0
    %565 = vmatpush1.msra.mxu0 0.0
    %566 = vmatprep.subr.mxu0 0.0
    %567 = vmatpush1.msra.mxu0 0.0
    %568 = vmatprep.subr.mxu0 0.0
    %569 = vmatpush1.msra.mxu0 0.0
    %570 = vmatprep.mubr.f32.mxu0 0.0
    %571 = vmatmul.mubr.f32.gmra.mrb[0].mxu0 %v331
    %v572 = vpop.f32.mrb[0].mxu0
    %v573 = vadd.f32 %v504, %v572
    %v574 = vpop.f32.mrb[0].mxu0
    %575 = vdwg.mxu0
    %v576 = vxor.u32 %v573, 2147483648
    %v577 = vmul.f32 %v576, 1.442695
    %v578 = vpow.pop %v577
    %v579 = vadd.f32 %v578, 1.0
    %v580 = vrcp.pop %v579
    %v581 = vmul.f32 1.0, %v580
    %v582 = vmul.f32 %v408, %v492
    %v583 = vtanh.pop %v582
    %v584 = vmul.f32 %v581, %v583
    %v585 = vld [vmem:[%s5] sm:$0xff]
    %v586 = vld [vmem:[%s5 + $0x8] sm:$0xff]
    %v587 = vld [vmem:[%s5 + $0x10] sm:$0xff]
    %v588 = vld [vmem:[%s5 + $0x18] sm:$0xff]
    %v589 = vld [vmem:[#allocation2] sm:$0x1]
    %v591 = vlaneseq
    %v592 = vshrl.u32 %v591, 7
    %v593 = vsub.s32 0, %v592
    %v594 = vrot.slane %v589, %v593
    %v597 = vsel %vm329, %v584, 0
    %599 = vmatprep.subr.mxu0 0.0
    %600 = vmatpush1.msra.mxu0 %v585
    %601 = vmatprep.subr.mxu0 0.0
    %602 = vmatpush1.msra.mxu0 %v586
    %603 = vmatprep.subr.mxu0 0.0
    %604 = vmatpush1.msra.mxu0 %v587
    %605 = vmatprep.subr.mxu0 0.0
    %606 = vmatpush1.msra.mxu0 %v588
    %607 = vmatprep.subr.mxu0 0.0
    %608 = vmatpush1.msra.mxu0 0.0
    %609 = vmatprep.subr.mxu0 0.0
    %610 = vmatpush1.msra.mxu0 0.0
    %611 = vmatprep.subr.mxu0 0.0
    %612 = vmatpush1.msra.mxu0 0.0
    %613 = vmatprep.subr.mxu0 0.0
    %614 = vmatpush1.msra.mxu0 0.0
    %615 = vmatprep.subr.mxu0 0.0
    %616 = vmatpush1.msra.mxu0 0.0
    %617 = vmatprep.subr.mxu0 0.0
    %618 = vmatpush1.msra.mxu0 0.0
    %619 = vmatprep.subr.mxu0 0.0
    %620 = vmatpush1.msra.mxu0 0.0
    %621 = vmatprep.subr.mxu0 0.0
    %622 = vmatpush1.msra.mxu0 0.0
    %623 = vmatprep.subr.mxu0 0.0
    %624 = vmatpush1.msra.mxu0 0.0
    %625 = vmatprep.subr.mxu0 0.0
    %626 = vmatpush1.msra.mxu0 0.0
    %627 = vmatprep.subr.mxu0 0.0
    %628 = vmatpush1.msra.mxu0 0.0
    %629 = vmatprep.subr.mxu0 0.0
    %630 = vmatpush1.msra.mxu0 0.0
    %631 = vmatprep.subr.mxu0 0.0
    %632 = vmatpush1.msra.mxu0 0.0
    %633 = vmatprep.subr.mxu0 0.0
    %634 = vmatpush1.msra.mxu0 0.0
    %635 = vmatprep.subr.mxu0 0.0
    %636 = vmatpush1.msra.mxu0 0.0
    %637 = vmatprep.subr.mxu0 0.0
    %638 = vmatpush1.msra.mxu0 0.0
    %639 = vmatprep.subr.mxu0 0.0
    %640 = vmatpush1.msra.mxu0 0.0
    %641 = vmatprep.subr.mxu0 0.0
    %642 = vmatpush1.msra.mxu0 0.0
    %643 = vmatprep.subr.mxu0 0.0
    %644 = vmatpush1.msra.mxu0 0.0
    %645 = vmatprep.subr.mxu0 0.0
    %646 = vmatpush1.msra.mxu0 0.0
    %647 = vmatprep.subr.mxu0 0.0
    %648 = vmatpush1.msra.mxu0 0.0
    %649 = vmatprep.subr.mxu0 0.0
    %650 = vmatpush1.msra.mxu0 0.0
    %651 = vmatprep.subr.mxu0 0.0
    %652 = vmatpush1.msra.mxu0 0.0
    %653 = vmatprep.subr.mxu0 0.0
    %654 = vmatpush1.msra.mxu0 0.0
    %655 = vmatprep.subr.mxu0 0.0
    %656 = vmatpush1.msra.mxu0 0.0
    %657 = vmatprep.subr.mxu0 0.0
    %658 = vmatpush1.msra.mxu0 0.0
    %659 = vmatprep.subr.mxu0 0.0
    %660 = vmatpush1.msra.mxu0 0.0
    %661 = vmatprep.subr.mxu0 0.0
    %662 = vmatpush1.msra.mxu0 0.0
    %663 = vmatprep.mubr.f32.mxu0 0.0
    %664 = vmatmul.mubr.f32.gmra.mrb[0].mxu0 %v597
    %v665 = vpop.f32.mrb[0].mxu0
    %v666 = vadd.f32 %v594, %v665
    %v667 = vpop.f32.mrb[0].mxu0
    %668 = vdwg.mxu0
    %vm669 = vcmask 7168
    %670 = vst.msk [vmem:[%s7] sm:$0xff] %vm669, %v666
    // Predicated region
    $region38: #{tpu_custom_call.1} parent=1 // pred_check
      _
    $region39: #{tpu_custom_call.1} parent=1 // pred_check_branch
      %672 = sbr.rel (0) target = $region41
    $region40: #{tpu_custom_call.1} parent=1 // pred_region
      _
    $region41: #{tpu_custom_call.1} parent=1 // pred_fallthru
      _
    // Predicated region
    $region42: #{tpu_custom_call.1} parent=1 // pred_check
      _
    $region43: #{tpu_custom_call.1} parent=1 // pred_check_branch
      %674 = sbr.rel (0) target = $region45
    $region44: #{tpu_custom_call.1} parent=1 // pred_region
      _
    $region45: #{tpu_custom_call.1} parent=1 // pred_fallthru
      _
    %675 = vsyncpa [#allocation4], 1
    %676 = vsyncpa [#allocation6], 1

</llo_original>
